<compile_context>
chip_gen: v7x
topology: tpu7x:2x2x1
jax: 0.10.0
libtpu: 0.0.40
codegen_flags: <defaults>
</compile_context>

<pallas_src>
import functools

import jax
import jax.numpy as jnp
from jax.experimental import pallas as pl
from jax.experimental.pallas import tpu as pltpu


def _round_up(x, m):
    return (x + m - 1) // m * m


def _sublane_pack(itemsize):
    # timesteps per 32-bit sublane group (second-to-last dim packing).
    return {4: 8, 2: 16, 1: 32}.get(int(itemsize), 8)


def _choose_tiling(B, H, T, itemsize, pack):
    """Pick (G, GT, n_groups).

    G        : timesteps per dense store slab (= dtype sublane pack).
    GT       : timesteps per manually-DMA'd input group (multiple of G).
    n_groups : DMA groups per grid step (Tt = n_groups * GT timesteps / step).
    """
    if T <= pack:
        return T, T, 1                       # single full-extent block
    bytes_per_t = max(B * H * itemsize, 1)   # one timestep's (B, H) slice
    # DMA group: aim for >= ~256 KiB per async copy; cap the per-group unroll.
    gt_cap = max(32, pack)
    GT = min(gt_cap, max(pack, ((256 * 1024) // bytes_per_t) // pack * pack))
    # Timesteps per grid step: amortize the ~0.35us fixed grid-step cost, keep
    # VMEM (output double buffer + input double buffer) around <= 12 MiB, and
    # keep >= 2 grid tiles so both v7x TensorCores get work.
    budget_t = max(pack, (12 * 1024 * 1024) // (2 * bytes_per_t) - GT - 1)
    tt_half = _round_up((T + 1) // 2, pack)
    Tt = max(pack, min(budget_t, tt_half, 8 * GT))
    if Tt >= GT:
        Tt = (Tt // GT) * GT
        return pack, GT, Tt // GT
    # Tile smaller than one DMA group: shrink the group instead.
    GT = max(pack, (Tt // pack) * pack)
    return pack, GT, 1
    # TODO(synk): very large B*H (one timestep slice >> VMEM budget) would need
    # an additional H tiling axis; not needed for typical RNN hidden sizes.


def _unpack_kernel(off_ref, bs_ref, data_ref, out_ref, buf_ref, sem_ref, *,
                   B, H, G, GT, n_groups, group_rows, P_src):
    """One grid step = n_groups double-buffered DMA groups of GT timesteps.

    off_ref, bs_ref : SMEM (T_pad,) int32 scalar prefetch (packed-row offset /
                      #active sequences per timestep; padded steps: off=P, bs=0)
    data_ref        : HBM  (P_src, H) packed rows (pl.ANY, manual DMA)
    out_ref         : VMEM (B, Tt, H) -> out[:, tile*Tt:(tile+1)*Tt, :]
    buf_ref         : VMEM (2, group_rows + B, H) double-buffered landing pad
    sem_ref         : DMA semaphores (2,)
    """
    Tt = n_groups * GT
    tile = pl.program_id(0)
    t0 = tile * Tt

    def issue(g, slot):
        # Clamp the window start so the fixed-size copy never runs past the end
        # of the packed data; clamping only moves the window earlier, so every
        # row this group actually uses stays inside it.
        base = jnp.minimum(off_ref[t0 + g * GT], P_src - group_rows)
        pltpu.make_async_copy(
            data_ref.at[pl.ds(base, group_rows)],
            buf_ref.at[slot, pl.ds(0, group_rows)],
            sem_ref.at[slot],
        ).start()

    def wait(slot):
        pltpu.make_async_copy(
            data_ref.at[pl.ds(0, group_rows)],          # shape-only descriptor
            buf_ref.at[slot, pl.ds(0, group_rows)],
            sem_ref.at[slot],
        ).wait()

    # The +B tail rows of each slot are never written by any DMA; zero them once
    # per step so nothing below ever consumes uninitialized VMEM.  (The per-row
    # select further down is what zeroes padding rows INSIDE the DMA'd window --
    # do not drop it.)
    buf_ref[:, group_rows:, :] = jnp.zeros((2, B, H), dtype=out_ref.dtype)

    # Prime slot 0.  Unconditional (every grid step primes its own pipeline), so
    # the step is self-contained and megacore-safe under "parallel".
    issue(0, 0)

    row_id = jax.lax.broadcasted_iota(jnp.int32, (B, H), 0)
    zero = jnp.zeros((B, H), dtype=out_ref.dtype)

    def read_schedule(g):
        # Hoisted SMEM scalar reads: keep them above the DMA .wait() (a wait
        # breaks SMEM store->load forwarding even for untouched addresses).
        tg = t0 + g * GT
        base = jnp.minimum(off_ref[tg], P_src - group_rows)
        locals_ = [off_ref[tg + j] - base for j in range(GT)]
        bss = [bs_ref[tg + j] for j in range(GT)]
        return locals_, bss

    def unpack_group(g, slot, locals_, bss):
        # GT timesteps -> GT // G dense (B, G, H) slab stores (full sublane set),
        # instead of one masked single-sublane store per timestep.
        for s in range(GT // G):
            parts = []
            for i in range(G):
                j = s * G + i
                rows = buf_ref[slot, pl.ds(locals_[j], B), :]      # (B, H)
                # rows >= bss[j] belong to other timesteps (or the zeroed tail);
                # this select implements the zero padding.
                parts.append(jnp.where(row_id < bss[j], rows, zero))
            slab = jnp.stack(parts, axis=1)                        # (B, G, H)
            dst = g * GT + s * G
            if not isinstance(dst, int):
                dst = pl.multiple_of(dst, G)
            out_ref[:, pl.ds(dst, G), :] = slab                    # dense store

    if n_groups <= 4:
        # Short static trip count: full Python unroll, static slots / offsets.
        for g in range(n_groups):
            slot = g & 1
            locals_, bss = read_schedule(g)
            wait(slot)
            if g + 1 < n_groups:
                issue(g + 1, 1 - slot)          # overlap next group's HBM read
            unpack_group(g, slot, locals_, bss)
    else:
        # Long tiles: a visible fori_loop keeps bundle count and vreg live
        # ranges bounded; the GT-timestep body above stays unrolled.
        def body(g, carry):
            slot = g & 1
            locals_, bss = read_schedule(g)
            wait(slot)

            @pl.when(g + 1 < n_groups)
            def _():
                issue(g + 1, 1 - slot)

            unpack_group(g, slot, locals_, bss)
            return carry

        jax.lax.fori_loop(0, n_groups, body, 0)


def pad_packed_sequence_pallas(data, batch_sizes, lengths):
    """JAX/Pallas equivalent of PadPackedSequence(batch_first=True).forward.

    data:        (P, H) packed rows (PackedSequence.data, enforce_sorted=True)
    batch_sizes: (T,)   int32 (PackedSequence.batch_sizes), T == max(lengths)
    lengths:     (B,)   original lengths (descending); only its static shape is
                        used, so the wrapper stays jittable (no host sync).
    returns:     (B, T, H) zero-padded, batch_first.
    """
    P, H = data.shape
    T = int(batch_sizes.shape[0])
    B = int(lengths.shape[0])
    dtype = data.dtype
    itemsize = jnp.dtype(dtype).itemsize

    # Lane-dense stores: pad the hidden dim to a multiple of 128 if needed.
    H_pad = _round_up(H, 128)
    if H_pad != H:
        data = jnp.pad(data, ((0, 0), (0, H_pad - H)))

    pack = _sublane_pack(itemsize)
    # TODO(synk): for sub-32-bit dtypes (bf16/int8) the dynamic packed-row reads
    # are not packing-aligned; Tt/GT are pack-aligned here, but a u32-bitcast
    # row layout would be needed for peak efficiency.
    G, GT, n_groups = _choose_tiling(B, H_pad, T, itemsize, pack)
    Tt = n_groups * GT
    n_tiles = -(-T // Tt)
    T_pad = n_tiles * Tt
    group_rows = GT * B

    # Glue: exclusive prefix sum of batch_sizes -> packed-row offset per step.
    batch_sizes = batch_sizes.astype(jnp.int32)
    offsets = jnp.concatenate(
        [jnp.zeros((1,), jnp.int32), jnp.cumsum(batch_sizes)[:-1].astype(jnp.int32)])

    # Pad the per-timestep scalar tables to a whole number of tiles
    # (padded steps: bsz=0 -> fully masked; offset=P keeps row windows in range).
    pad_t = T_pad - T
    if pad_t:
        offsets = jnp.concatenate([offsets, jnp.full((pad_t,), P, jnp.int32)])
        batch_sizes = jnp.concatenate([batch_sizes, jnp.zeros((pad_t,), jnp.int32)])

    # Only pad the packed data when it is smaller than a single DMA window
    # (tiny inputs only); the common case has NO O(P*H) padding pass.
    P_src = max(P, group_rows)
    if P_src > P:
        data = jnp.concatenate([data, jnp.zeros((P_src - P, H_pad), dtype)], axis=0)

    kernel = functools.partial(
        _unpack_kernel, B=B, H=H_pad, G=G, GT=GT, n_groups=n_groups,
        group_rows=group_rows, P_src=P_src)

    cost = pl.CostEstimate(
        flops=0, transcendentals=0,
        bytes_accessed=int((n_tiles * n_groups * group_rows + B * T) * H_pad * itemsize),
    )

    out = pl.pallas_call(
        kernel,
        out_shape=jax.ShapeDtypeStruct((B, T, H_pad), dtype),
        grid_spec=pltpu.PrefetchScalarGridSpec(
            num_scalar_prefetch=2,                       # offsets, batch_sizes -> SMEM
            grid=(n_tiles,),
            in_specs=[pl.BlockSpec(memory_space=pl.ANY)],    # packed data stays in HBM
            out_specs=pl.BlockSpec((B, Tt, H_pad), lambda i, off, bs: (0, i, 0)),
            scratch_shapes=[
                pltpu.VMEM((2, group_rows + B, H_pad), dtype),   # double-buffered landing pad
                pltpu.SemaphoreType.DMA((2,)),
            ],
        ),
        compiler_params=pltpu.CompilerParams(
            dimension_semantics=("parallel",),   # each step is fully self-contained
            vmem_limit_bytes=32 * 1024 * 1024,
        ),
        cost_estimate=cost,
    )(offsets, batch_sizes, data)

    # TODO(synk): a PackedSequence built with enforce_sorted=False would need its
    # unsorted_indices permutation applied to the batch dim here.
    if H_pad != H:
        out = out[:, :, :H]
    return out


# ----------------------------------------------------------------------------
# Test harness
# ----------------------------------------------------------------------------
def _pack(padded, lengths):
    """Build PackedSequence (data, batch_sizes) from a padded (B, T, H) tensor."""
    _, T, _ = padded.shape
    batch_sizes = jnp.array([int((lengths > t).sum()) for t in range(T)], jnp.int32)
    rows = [padded[: int(batch_sizes[t]), t, :] for t in range(T)]
    return jnp.concatenate(rows, axis=0), batch_sizes


def _reference(padded, lengths):
    _, T, _ = padded.shape
    t_idx = jnp.arange(T)[None, :, None]
    return jnp.where(t_idx < lengths[:, None, None], padded,
                     jnp.zeros((), padded.dtype))


if __name__ == "__main__":
    key = jax.random.PRNGKey(0)
    k1, k2, k3 = jax.random.split(key, 3)

    # Case 1: tiny shapes (single-group, fully static path).
    B1, H1 = 4, 128
    lengths1 = jnp.array([16, 12, 9, 8], dtype=jnp.int32)       # descending
    T1 = int(lengths1.max())
    padded1 = jax.random.normal(k1, (B1, T1, H1), dtype=jnp.float32)
    data1, bs1 = _pack(padded1, lengths1)
    out1 = pad_packed_sequence_pallas(data1, bs1, lengths1)
    jax.block_until_ready(out1)
    assert out1.shape == (B1, T1, H1)
    assert jnp.allclose(out1, _reference(padded1, lengths1), atol=1e-6), \
        "case 1 mismatch vs pad_packed_sequence reference"

    # Case 2: longer / ragged (multi-group double-buffered DMA, fori_loop path,
    # clamped DMA windows and padded tail timesteps).
    B2, H2 = 16, 512
    lens_tail = jax.random.randint(k2, (B2 - 1,), 1, 78)
    lengths2 = jnp.sort(jnp.concatenate([jnp.array([77]), lens_tail]))[::-1]
    lengths2 = lengths2.astype(jnp.int32)
    T2 = int(lengths2.max())
    padded2 = jax.random.normal(k3, (B2, T2, H2), dtype=jnp.float32)
    data2, bs2 = _pack(padded2, lengths2)
    out2 = pad_packed_sequence_pallas(data2, bs2, lengths2)
    jax.block_until_ready(out2)
    assert out2.shape == (B2, T2, H2)
    assert jnp.allclose(out2, _reference(padded2, lengths2), atol=1e-6), \
        "case 2 mismatch vs pad_packed_sequence reference"

    print("KERNEL_OK")
</pallas_src>

<mosaic_0001>
module attributes {stable_mosaic.version = 11 : i64} {
  func.func @_unpack_kernel(%arg0: i32, %arg1: memref<16xi32, #tpu.memory_space<smem>>, %arg2: memref<16xi32, #tpu.memory_space<smem>>, %arg3: memref<45x128xf32, #tpu.memory_space<any>>, %arg4: memref<4x8x128xf32, #tpu.memory_space<vmem>>, %arg5: memref<2x36x128xf32, #tpu.memory_space<vmem>>, %arg6: memref<2x!tpu.dma_semaphore, #tpu.memory_space<semaphore_mem>>) attributes {dimension_semantics = [#tpu.dimension_semantics<parallel>], iteration_bounds = array<i64: 2>, scalar_prefetch = 2 : i64, scratch_operands = 2 : i64, tpu.core_type = #tpu.core_type<tc>, window_params = [{}, {transform_indices = @transform_1, window_bounds = array<i64: 4, 8, 128>}]} {
    %c8_i32 = arith.constant 8 : i32
    %0 = arith.muli %arg0, %c8_i32 : i32
    %cst = arith.constant 0.000000e+00 : f32
    %1 = vector.broadcast %cst : f32 to vector<2x4x128xf32>
    %c0 = arith.constant 0 : index
    %c32 = arith.constant 32 : index
    %c0_0 = arith.constant 0 : index
    %2 = vector.load %arg5[%c0, %c32, %c0_0] : memref<2x36x128xf32, #tpu.memory_space<vmem>>, vector<2x4x128xf32>
    tpu.vector_store %arg5[%c0, %c32, %c0_0], %1 {strides = array<i32>} : memref<2x36x128xf32, #tpu.memory_space<vmem>>, vector<2x4x128xf32>,
    %c0_i32 = arith.constant 0 : i32
    %3 = arith.addi %0, %c0_i32 : i32
    %4 = arith.index_cast %3 : i32 to index
    %5 = memref.load %arg1[%4] : memref<16xi32, #tpu.memory_space<smem>>
    %c13_i32 = arith.constant 13 : i32
    %6 = arith.minsi %5, %c13_i32 : i32
    %c0_i32_1 = arith.constant 0 : i32
    %c0_i32_2 = arith.constant 0 : i32
    %c0_i32_3 = arith.constant 0 : i32
    %7 = tpu.memref_slice %arg3[%6, %c0_i32_3] : memref<45x128xf32, #tpu.memory_space<any>> -> memref<32x128xf32, #tpu.memory_space<any>>
    %c0_i32_4 = arith.constant 0 : i32
    %c0_i32_5 = arith.constant 0 : i32
    %8 = tpu.memref_slice %arg5[%c0_i32_1, %c0_i32_4, %c0_i32_5] : memref<2x36x128xf32, #tpu.memory_space<vmem>> -> memref<1x32x128xf32, #tpu.memory_space<vmem>>
    %9 = tpu.memref_squeeze %8 : memref<1x32x128xf32, #tpu.memory_space<vmem>> -> memref<32x128xf32, #tpu.memory_space<vmem>>
    %10 = tpu.memref_slice %arg6[%c0_i32_2] : memref<2x!tpu.dma_semaphore, #tpu.memory_space<semaphore_mem>> -> memref<1x!tpu.dma_semaphore, #tpu.memory_space<semaphore_mem>>
    %11 = tpu.memref_squeeze %10 : memref<1x!tpu.dma_semaphore, #tpu.memory_space<semaphore_mem>> -> memref<!tpu.dma_semaphore, #tpu.memory_space<semaphore_mem>>
    tpu.enqueue_dma source(%7 : memref<32x128xf32, #tpu.memory_space<any>>) target(%9 : memref<32x128xf32, #tpu.memory_space<vmem>>) target_semaphore(%11 : memref<!tpu.dma_semaphore, #tpu.memory_space<semaphore_mem>>)
    %12 = tpu.iota {dimensions = array<i32: 0>} : vector<4x128xi32>
    %cst_6 = arith.constant 0.000000e+00 : f32
    %13 = vector.broadcast %cst_6 : f32 to vector<4x128xf32>
    %c0_i32_7 = arith.constant 0 : i32
    %14 = arith.addi %0, %c0_i32_7 : i32
    %15 = arith.index_cast %14 : i32 to index
    %16 = memref.load %arg1[%15] : memref<16xi32, #tpu.memory_space<smem>>
    %c13_i32_8 = arith.constant 13 : i32
    %17 = arith.minsi %16, %c13_i32_8 : i32
    %c0_i32_9 = arith.constant 0 : i32
    %18 = arith.addi %14, %c0_i32_9 : i32
    %19 = arith.index_cast %18 : i32 to index
    %20 = memref.load %arg1[%19] : memref<16xi32, #tpu.memory_space<smem>>
    %21 = arith.subi %20, %17 : i32
    %c1_i32 = arith.constant 1 : i32
    %22 = arith.addi %14, %c1_i32 : i32
    %23 = arith.index_cast %22 : i32 to index
    %24 = memref.load %arg1[%23] : memref<16xi32, #tpu.memory_space<smem>>
    %25 = arith.subi %24, %17 : i32
    %c2_i32 = arith.constant 2 : i32
    %26 = arith.addi %14, %c2_i32 : i32
    %27 = arith.index_cast %26 : i32 to index
    %28 = memref.load %arg1[%27] : memref<16xi32, #tpu.memory_space<smem>>
    %29 = arith.subi %28, %17 : i32
    %c3_i32 = arith.constant 3 : i32
    %30 = arith.addi %14, %c3_i32 : i32
    %31 = arith.index_cast %30 : i32 to index
    %32 = memref.load %arg1[%31] : memref<16xi32, #tpu.memory_space<smem>>
    %33 = arith.subi %32, %17 : i32
    %c4_i32 = arith.constant 4 : i32
    %34 = arith.addi %14, %c4_i32 : i32
    %35 = arith.index_cast %34 : i32 to index
    %36 = memref.load %arg1[%35] : memref<16xi32, #tpu.memory_space<smem>>
    %37 = arith.subi %36, %17 : i32
    %c5_i32 = arith.constant 5 : i32
    %38 = arith.addi %14, %c5_i32 : i32
    %39 = arith.index_cast %38 : i32 to index
    %40 = memref.load %arg1[%39] : memref<16xi32, #tpu.memory_space<smem>>
    %41 = arith.subi %40, %17 : i32
    %c6_i32 = arith.constant 6 : i32
    %42 = arith.addi %14, %c6_i32 : i32
    %43 = arith.index_cast %42 : i32 to index
    %44 = memref.load %arg1[%43] : memref<16xi32, #tpu.memory_space<smem>>
    %45 = arith.subi %44, %17 : i32
    %c7_i32 = arith.constant 7 : i32
    %46 = arith.addi %14, %c7_i32 : i32
    %47 = arith.index_cast %46 : i32 to index
    %48 = memref.load %arg1[%47] : memref<16xi32, #tpu.memory_space<smem>>
    %49 = arith.subi %48, %17 : i32
    %c0_i32_10 = arith.constant 0 : i32
    %50 = arith.addi %14, %c0_i32_10 : i32
    %51 = arith.index_cast %50 : i32 to index
    %52 = memref.load %arg2[%51] : memref<16xi32, #tpu.memory_space<smem>>
    %c1_i32_11 = arith.constant 1 : i32
    %53 = arith.addi %14, %c1_i32_11 : i32
    %54 = arith.index_cast %53 : i32 to index
    %55 = memref.load %arg2[%54] : memref<16xi32, #tpu.memory_space<smem>>
    %c2_i32_12 = arith.constant 2 : i32
    %56 = arith.addi %14, %c2_i32_12 : i32
    %57 = arith.index_cast %56 : i32 to index
    %58 = memref.load %arg2[%57] : memref<16xi32, #tpu.memory_space<smem>>
    %c3_i32_13 = arith.constant 3 : i32
    %59 = arith.addi %14, %c3_i32_13 : i32
    %60 = arith.index_cast %59 : i32 to index
    %61 = memref.load %arg2[%60] : memref<16xi32, #tpu.memory_space<smem>>
    %c4_i32_14 = arith.constant 4 : i32
    %62 = arith.addi %14, %c4_i32_14 : i32
    %63 = arith.index_cast %62 : i32 to index
    %64 = memref.load %arg2[%63] : memref<16xi32, #tpu.memory_space<smem>>
    %c5_i32_15 = arith.constant 5 : i32
    %65 = arith.addi %14, %c5_i32_15 : i32
    %66 = arith.index_cast %65 : i32 to index
    %67 = memref.load %arg2[%66] : memref<16xi32, #tpu.memory_space<smem>>
    %c6_i32_16 = arith.constant 6 : i32
    %68 = arith.addi %14, %c6_i32_16 : i32
    %69 = arith.index_cast %68 : i32 to index
    %70 = memref.load %arg2[%69] : memref<16xi32, #tpu.memory_space<smem>>
    %c7_i32_17 = arith.constant 7 : i32
    %71 = arith.addi %14, %c7_i32_17 : i32
    %72 = arith.index_cast %71 : i32 to index
    %73 = memref.load %arg2[%72] : memref<16xi32, #tpu.memory_space<smem>>
    %c0_i32_18 = arith.constant 0 : i32
    %c0_i32_19 = arith.constant 0 : i32
    %c0_i32_20 = arith.constant 0 : i32
    %c0_i32_21 = arith.constant 0 : i32
    %74 = tpu.memref_slice %arg3[%c0_i32_20, %c0_i32_21] : memref<45x128xf32, #tpu.memory_space<any>> -> memref<32x128xf32, #tpu.memory_space<any>>
    %c0_i32_22 = arith.constant 0 : i32
    %c0_i32_23 = arith.constant 0 : i32
    %75 = tpu.memref_slice %arg5[%c0_i32_18, %c0_i32_22, %c0_i32_23] : memref<2x36x128xf32, #tpu.memory_space<vmem>> -> memref<1x32x128xf32, #tpu.memory_space<vmem>>
    %76 = tpu.memref_squeeze %75 : memref<1x32x128xf32, #tpu.memory_space<vmem>> -> memref<32x128xf32, #tpu.memory_space<vmem>>
    %77 = tpu.memref_slice %arg6[%c0_i32_19] : memref<2x!tpu.dma_semaphore, #tpu.memory_space<semaphore_mem>> -> memref<1x!tpu.dma_semaphore, #tpu.memory_space<semaphore_mem>>
    %78 = tpu.memref_squeeze %77 : memref<1x!tpu.dma_semaphore, #tpu.memory_space<semaphore_mem>> -> memref<!tpu.dma_semaphore, #tpu.memory_space<semaphore_mem>>
    tpu.wait_dma2 semaphore(%78 : memref<!tpu.dma_semaphore, #tpu.memory_space<semaphore_mem>>) src(%74 : memref<32x128xf32, #tpu.memory_space<any>>) dst(%76 : memref<32x128xf32, #tpu.memory_space<vmem>>)
    %c0_24 = arith.constant 0 : index
    %79 = arith.index_cast %21 : i32 to index
    %c0_25 = arith.constant 0 : index
    %80 = vector.load %arg5[%c0_24, %79, %c0_25] : memref<2x36x128xf32, #tpu.memory_space<vmem>>, vector<1x4x128xf32>
    %81 = vector.shape_cast %80 : vector<1x4x128xf32> to vector<4x128xf32>
    %82 = vector.broadcast %52 : i32 to vector<4x128xi32>
    %83 = arith.cmpi slt, %12, %82 : vector<4x128xi32>
    %84 = arith.select %83, %81, %13 : vector<4x128xi1>, vector<4x128xf32>
    %c0_26 = arith.constant 0 : index
    %85 = arith.index_cast %25 : i32 to index
    %c0_27 = arith.constant 0 : index
    %86 = vector.load %arg5[%c0_26, %85, %c0_27] : memref<2x36x128xf32, #tpu.memory_space<vmem>>, vector<1x4x128xf32>
    %87 = vector.shape_cast %86 : vector<1x4x128xf32> to vector<4x128xf32>
    %88 = vector.broadcast %55 : i32 to vector<4x128xi32>
    %89 = arith.cmpi slt, %12, %88 : vector<4x128xi32>
    %90 = arith.select %89, %87, %13 : vector<4x128xi1>, vector<4x128xf32>
    %c0_28 = arith.constant 0 : index
    %91 = arith.index_cast %29 : i32 to index
    %c0_29 = arith.constant 0 : index
    %92 = vector.load %arg5[%c0_28, %91, %c0_29] : memref<2x36x128xf32, #tpu.memory_space<vmem>>, vector<1x4x128xf32>
    %93 = vector.shape_cast %92 : vector<1x4x128xf32> to vector<4x128xf32>
    %94 = vector.broadcast %58 : i32 to vector<4x128xi32>
    %95 = arith.cmpi slt, %12, %94 : vector<4x128xi32>
    %96 = arith.select %95, %93, %13 : vector<4x128xi1>, vector<4x128xf32>
    %c0_30 = arith.constant 0 : index
    %97 = arith.index_cast %33 : i32 to index
    %c0_31 = arith.constant 0 : index
    %98 = vector.load %arg5[%c0_30, %97, %c0_31] : memref<2x36x128xf32, #tpu.memory_space<vmem>>, vector<1x4x128xf32>
    %99 = vector.shape_cast %98 : vector<1x4x128xf32> to vector<4x128xf32>
    %100 = vector.broadcast %61 : i32 to vector<4x128xi32>
    %101 = arith.cmpi slt, %12, %100 : vector<4x128xi32>
    %102 = arith.select %101, %99, %13 : vector<4x128xi1>, vector<4x128xf32>
    %c0_32 = arith.constant 0 : index
    %103 = arith.index_cast %37 : i32 to index
    %c0_33 = arith.constant 0 : index
    %104 = vector.load %arg5[%c0_32, %103, %c0_33] : memref<2x36x128xf32, #tpu.memory_space<vmem>>, vector<1x4x128xf32>
    %105 = vector.shape_cast %104 : vector<1x4x128xf32> to vector<4x128xf32>
    %106 = vector.broadcast %64 : i32 to vector<4x128xi32>
    %107 = arith.cmpi slt, %12, %106 : vector<4x128xi32>
    %108 = arith.select %107, %105, %13 : vector<4x128xi1>, vector<4x128xf32>
    %c0_34 = arith.constant 0 : index
    %109 = arith.index_cast %41 : i32 to index
    %c0_35 = arith.constant 0 : index
    %110 = vector.load %arg5[%c0_34, %109, %c0_35] : memref<2x36x128xf32, #tpu.memory_space<vmem>>, vector<1x4x128xf32>
    %111 = vector.shape_cast %110 : vector<1x4x128xf32> to vector<4x128xf32>
    %112 = vector.broadcast %67 : i32 to vector<4x128xi32>
    %113 = arith.cmpi slt, %12, %112 : vector<4x128xi32>
    %114 = arith.select %113, %111, %13 : vector<4x128xi1>, vector<4x128xf32>
    %c0_36 = arith.constant 0 : index
    %115 = arith.index_cast %45 : i32 to index
    %c0_37 = arith.constant 0 : index
    %116 = vector.load %arg5[%c0_36, %115, %c0_37] : memref<2x36x128xf32, #tpu.memory_space<vmem>>, vector<1x4x128xf32>
    %117 = vector.shape_cast %116 : vector<1x4x128xf32> to vector<4x128xf32>
    %118 = vector.broadcast %70 : i32 to vector<4x128xi32>
    %119 = arith.cmpi slt, %12, %118 : vector<4x128xi32>
    %120 = arith.select %119, %117, %13 : vector<4x128xi1>, vector<4x128xf32>
    %c0_38 = arith.constant 0 : index
    %121 = arith.index_cast %49 : i32 to index
    %c0_39 = arith.constant 0 : index
    %122 = vector.load %arg5[%c0_38, %121, %c0_39] : memref<2x36x128xf32, #tpu.memory_space<vmem>>, vector<1x4x128xf32>
    %123 = vector.shape_cast %122 : vector<1x4x128xf32> to vector<4x128xf32>
    %124 = vector.broadcast %73 : i32 to vector<4x128xi32>
    %125 = arith.cmpi slt, %12, %124 : vector<4x128xi32>
    %126 = arith.select %125, %123, %13 : vector<4x128xi1>, vector<4x128xf32>
    %127 = vector.shape_cast %84 : vector<4x128xf32> to vector<4x1x128xf32>
    %128 = vector.shape_cast %90 : vector<4x128xf32> to vector<4x1x128xf32>
    %129 = vector.shape_cast %96 : vector<4x128xf32> to vector<4x1x128xf32>
    %130 = vector.shape_cast %102 : vector<4x128xf32> to vector<4x1x128xf32>
    %131 = vector.shape_cast %108 : vector<4x128xf32> to vector<4x1x128xf32>
    %132 = vector.shape_cast %114 : vector<4x128xf32> to vector<4x1x128xf32>
    %133 = vector.shape_cast %120 : vector<4x128xf32> to vector<4x1x128xf32>
    %134 = vector.shape_cast %126 : vector<4x128xf32> to vector<4x1x128xf32>
    %135 = tpu.concatenate %127, %128, %129, %130, %131, %132, %133, %134 in 1 : vector<4x1x128xf32>, vector<4x1x128xf32>, vector<4x1x128xf32>, vector<4x1x128xf32>, vector<4x1x128xf32>, vector<4x1x128xf32>, vector<4x1x128xf32>, vector<4x1x128xf32> -> vector<4x8x128xf32>
    %c0_40 = arith.constant 0 : index
    %c0_41 = arith.constant 0 : index
    %c0_42 = arith.constant 0 : index
    %136 = vector.load %arg4[%c0_40, %c0_41, %c0_42] : memref<4x8x128xf32, #tpu.memory_space<vmem>>, vector<4x8x128xf32>
    tpu.vector_store %arg4[%c0_40, %c0_41, %c0_42], %135 {strides = array<i32>} : memref<4x8x128xf32, #tpu.memory_space<vmem>>, vector<4x8x128xf32>,
    return
  }
  func.func @transform_1(%arg0: i32, %arg1: memref<16xi32, #tpu.memory_space<smem>>, %arg2: memref<16xi32, #tpu.memory_space<smem>>) -> (i32, i32, i32) {
    %c0_i32 = arith.constant 0 : i32
    %c0_i32_0 = arith.constant 0 : i32
    %c0_i32_1 = arith.constant 0 : i32
    return %c0_i32, %arg0, %c0_i32_0 : i32, i32, i32
  }
}

</mosaic_0001>

<llo_original>
// kernel: tpu_custom_call.1
$region0: #{tpu_custom_call.1}
  #allocation0 [shape = 'u32[]', space=smem, size = 0x4, offset = 0x4, fixed_abs, tag = 'smem constant byte address 0x4 - core index']
  #allocation1 [shape = 'u32[144,128]{1,0:T(1,128)}', space=vmem, size = 0x12000, scoped, tag = 'internal scratch']
  #allocation2 [shape = 'f32[2,36,128]{2,1,0:T(8,128)}', space=vmem, size = 0xa000, scoped, tag = 'scratch operand']
  #allocation3 [shape = 's32[2]{0}', space=sflag, size = 0x8, scoped, tag = 'scratch operand']
  #allocation4 [shape = 's32[1]{0}', space=sflag, size = 0x4, scoped, tag = 'scoped memory for tpu_custom_call.1']
  #allocation5 [shape = 'u8[512]{0}', space=smem, size = 0x200, scoped, tag = 'prefetched SMEM operand 0']
  #allocation6 [shape = 'u8[512]{0}', space=smem, size = 0x200, scoped, tag = 'prefetched SMEM operand 1']
  #allocation9 [shape = 's32[]', space=sflag, size = 0x4, offset = 0, fixed_abs, tag = 'sflag constant byte address 0x0 - dummy sync flag']
  #allocation10 [shape = 's32[]', space=sflag, size = 0x4, offset = 0, fixed_abs, tag = 'sflag constant byte address 0x0 - dummy sync flag']
  #allocation11 [shape = 'u32[]', space=smem, size = 0x4, offset = 0x44, fixed_abs, tag = 'smem constant byte address 0x44 - assertion arg 0']
  #allocation12 [shape = 'u32[]', space=smem, size = 0x4, offset = 0x48, fixed_abs, tag = 'smem constant byte address 0x48 - assertion arg 1']
  %s0 = inlined_call_operand.hbm [shape: s32[16], index: 0, kind: input, shape index: {}]
  %s1 = inlined_call_operand.vmem [shape: s32[16], index: 1, kind: input, shape index: {}]
  %s2 = inlined_call_operand.hbm [shape: f32[45,128], index: 2, kind: input, shape index: {}]
  %s3 = inlined_call_operand.hbm [shape: f32[4,16,128], index: 3, kind: output, shape index: {}]
  %s4 = sld [smem:[#allocation0]]
  $region29: #{tpu_custom_call.1} parent=0
    _
  %s6 = ssub.s32 1, %s4
  %s7 = scalar_select 0, %s6, %s4
  %9 = dma.hbm_to_smem %s0, 16, [#allocation5], [#allocation4]
  %s10 = sshll.u32 %s1, 4
  %s11 = int_to_ptr.vmem [resolvable:$true] %s10
  %13 = dma.vmem_to_smem %s11, 16, [#allocation6], [#allocation4]
  %14 = dma.done [#allocation4], 32
  %15 = sfence
  $region1: #{tpu_custom_call.1} parent=0
    #allocation7 [shape = 'u8[32768]{0}', space=vmem, size = 0x8000, scoped, tag = 'output window, operand 0']
    #allocation8 [shape = 's32[2]{0}', space=sflag, size = 0x8, scoped, tag = 'scoped memory for tpu_custom_call.1']
    %16 = vsyncpa [#allocation8], 0
    %s17 = scalar_lea.sflag [#allocation8], 1
    %18 = vsyncpa %s17, 0
    loop: start=0, step=1, limit=3
    $region2: #{tpu_custom_call.1} parent=1 // loop_pre_header
      _
    $region3: #{tpu_custom_call.1} parent=1 // loop_header
      %s20 = sphi 0, %s24
      %p21 = scmp.ge.s32.totalorder %s20, 3
      %s29 = sphi 0, %s31
      %s32 = sphi 0, %s29
      %s42 = sphi 0, %s32
    $region4: #{tpu_custom_call.1} parent=1 // loop_header_branch
      %23 = sbr.rel (%p21) target = $region8
    $region5: #{tpu_custom_call.1} parent=1 // loop_body
      %s25 = ssub.s32 %s20, 1
      %s26 = sadd.s32 %s20, 1
      %s27 = ssub.s32 %s20, %s26
      %p28 = scmp.eq.s32.totalorder %s27, 0
      %s30 = sadd.s32 %s29, 1
      %s31 = scalar_select %p28, %s29, %s30
      %p33 = pneg %p28
      %p34 = scmp.eq.s32.totalorder %s20, 1
      %p35 = por %p33, %p34
      %p36 = scmp.ne.s32.totalorder %s29, %s32
      %p37 = scmp.eq.s32.totalorder %s20, 0
      %p38 = por %p36, %p37
      %p39 = scmp.ne.s32.totalorder %s29, %s32
      %p40 = scmp.eq.s32.totalorder %s25, 1
      %p41 = por %p39, %p40
      %p43 = scmp.ne.s32.totalorder %s32, %s42
      %p44 = scmp.eq.s32.totalorder %s25, 0
      %p45 = por %p43, %p44
      %p46 = scmp.lt.s32.totalorder %s20, 2
      // Predicated region
      $region9: #{tpu_custom_call.1} parent=5 // pred_check
        %p47 = pneg %p46
      $region10: #{tpu_custom_call.1} parent=5 // pred_check_branch
        %49 = sbr.rel (%p47) target = $region12
      $region11: #{tpu_custom_call.1} parent=5 // pred_region
        %p50 = pneg %p38
        %p51 = pneg %p35
        %s52 = sand.u32 %s29, 1
        %s53 = scalar_lea.sflag [#allocation8], %s52
        %s54 = sand.u32 %s29, 1
        %s55 = smul.addr %s54, 32
        %s56 = scalar_lea.vmem [#allocation7], %s55
        %s57 = smul.u32 %s20, 8
        %58 = vst [vmem:[#allocation2 + $0x20] sm:$0xf] 0.0
        %59 = vst [vmem:[#allocation2 + $0x48] sm:$0xf] 0.0
        %s60 = sld [smem:[#allocation5 + %s57]]
        %p61 = scmp.lt.s32.totalorder %s60, 13
        %s62 = scalar_select %p61, %s60, 13
        %s63 = smul.addr %s62, 16
        %s64 = scalar_lea.hbm %s2, %s63
        // Predicated region
        $region13: #{tpu_custom_call.1} parent=11 // pred_check
          _
        $region14: #{tpu_custom_call.1} parent=11 // pred_check_branch
          %66 = sbr.rel target = $region16
        $region15: #{tpu_custom_call.1} parent=11 // pred_region
          %67 = sst [smem:[#allocation11]] [#allocation10]
          %68 = sst [smem:[#allocation12]] [#allocation9]
        $region16: #{tpu_custom_call.1} parent=11 // pred_fallthru
          _
        %70 = shalt.err (0)
        %s72 = sshll.u32 [#allocation2], 4
        %s73 = int_to_ptr.vmem [resolvable:$true] %s72
        %75 = dma.hbm_to_vmem [thread:$0]  %s64, 512, %s73, [#allocation3]
        %v76 = vlaneseq
        %v77 = vshrl.u32 %v76, 7
        %s78 = sld [smem:[#allocation5 + %s57]]
        %p79 = scmp.lt.s32.totalorder %s78, 13
        %s80 = scalar_select %p79, %s78, 13
        %s81 = ssub.s32 %s78, %s80
        %s82 = sadd.s32 %s57, 1
        %s83 = sld [smem:[#allocation5 + %s82]]
        %s84 = ssub.s32 %s83, %s80
        %s85 = sadd.s32 %s57, 2
        %s86 = sld [smem:[#allocation5 + %s85]]
        %s87 = ssub.s32 %s86, %s80
        %s88 = sadd.s32 %s57, 3
        %s89 = sld [smem:[#allocation5 + %s88]]
        %s90 = ssub.s32 %s89, %s80
        %s91 = sadd.s32 %s57, 4
        %s92 = sld [smem:[#allocation5 + %s91]]
        %s93 = ssub.s32 %s92, %s80
        %s94 = sadd.s32 %s57, 5
        %s95 = sld [smem:[#allocation5 + %s94]]
        %s96 = ssub.s32 %s95, %s80
        %s97 = sadd.s32 %s57, 6
        %s98 = sld [smem:[#allocation5 + %s97]]
        %s99 = ssub.s32 %s98, %s80
        %s100 = sadd.s32 %s57, 7
        %s101 = sld [smem:[#allocation5 + %s100]]
        %s102 = ssub.s32 %s101, %s80
        %s103 = sld [smem:[#allocation6 + %s57]]
        %s104 = sld [smem:[#allocation6 + %s82]]
        %s105 = sld [smem:[#allocation6 + %s85]]
        %s106 = sld [smem:[#allocation6 + %s88]]
        %s107 = sld [smem:[#allocation6 + %s91]]
        %s108 = sld [smem:[#allocation6 + %s94]]
        %s109 = sld [smem:[#allocation6 + %s97]]
        %s110 = sld [smem:[#allocation6 + %s100]]
        %s111 = smul.u32 32, 1
        %s112 = sshll.u32 %s111, 4
        %113 = dma.done [#allocation3], %s112
        %s114 = scalar_lea.vmem [#allocation2], %s81
        %v115 = vld [vmem:[%s114] sm:$0xf]
        %v116 = vstv %s103
        %vm117 = vcmp.lt.s32.totalorder %v77, %v116
        %v118 = vsel %vm117, %v115, 0.0
        %s119 = scalar_lea.vmem [#allocation2], %s84
        %v120 = vld [vmem:[%s119] sm:$0xf]
        %v121 = vstv %s104
        %vm122 = vcmp.lt.s32.totalorder %v77, %v121
        %v123 = vsel %vm122, %v120, 0.0
        %s124 = scalar_lea.vmem [#allocation2], %s87
        %v125 = vld [vmem:[%s124] sm:$0xf]
        %v126 = vstv %s105
        %vm127 = vcmp.lt.s32.totalorder %v77, %v126
        %v128 = vsel %vm127, %v125, 0.0
        %s129 = scalar_lea.vmem [#allocation2], %s90
        %v130 = vld [vmem:[%s129] sm:$0xf]
        %v131 = vstv %s106
        %vm132 = vcmp.lt.s32.totalorder %v77, %v131
        %v133 = vsel %vm132, %v130, 0.0
        %s134 = scalar_lea.vmem [#allocation2], %s93
        %v135 = vld [vmem:[%s134] sm:$0xf]
        %v136 = vstv %s107
        %vm137 = vcmp.lt.s32.totalorder %v77, %v136
        %v138 = vsel %vm137, %v135, 0.0
        %s139 = scalar_lea.vmem [#allocation2], %s96
        %v140 = vld [vmem:[%s139] sm:$0xf]
        %v141 = vstv %s108
        %vm142 = vcmp.lt.s32.totalorder %v77, %v141
        %v143 = vsel %vm142, %v140, 0.0
        %s144 = scalar_lea.vmem [#allocation2], %s99
        %v145 = vld [vmem:[%s144] sm:$0xf]
        %v146 = vstv %s109
        %vm147 = vcmp.lt.s32.totalorder %v77, %v146
        %v148 = vsel %vm147, %v145, 0.0
        %s149 = scalar_lea.vmem [#allocation2], %s102
        %v150 = vld [vmem:[%s149] sm:$0xf]
        %v151 = vstv %s110
        %vm152 = vcmp.lt.s32.totalorder %v77, %v151
        %v153 = vsel %vm152, %v150, 0.0
        %v156 = vunpack.c.l.s4 1966171168
        %v157 = vunpack.c.0.s8 %v156
        %v158 = vlaneseq
        %v159 = vshrl.u32 %v158, 7
        %v160 = vsub.s32 %v157, %v159
        %v161 = vrot.slane %v118, %v160
        %v162 = vcombine.high %v161, %v161
        %v164 = vunpack.c.l.s4 1966171168
        %v165 = vunpack.c.0.s8 %v164
        %v166 = vlaneseq
        %v167 = vshrl.u32 %v166, 7
        %v168 = vsub.s32 %v165, %v167
        %v169 = vrot.slane %v161, %v168
        %v171 = vunpack.c.l.s4 1966171168
        %v172 = vunpack.c.0.s8 %v171
        %v173 = vlaneseq
        %v174 = vshrl.u32 %v173, 7
        %v175 = vsub.s32 %v172, %v174
        %v176 = vrot.slane %v162, %v175
        %v177 = vcombine.high %v169, %v169
        %v178 = vcombine.high %v176, %v176
        %v185 = vunpack.c.l.s4 1966171168
        %v186 = vunpack.c.0.s8 %v185
        %v187 = vlaneseq
        %v188 = vshrl.u32 %v187, 7
        %v189 = vsub.s32 %v186, %v188
        %v190 = vrot.slane %v123, %v189
        %v191 = vcombine.high %v190, %v190
        %v193 = vunpack.c.l.s4 1966171168
        %v194 = vunpack.c.0.s8 %v193
        %v195 = vlaneseq
        %v196 = vshrl.u32 %v195, 7
        %v197 = vsub.s32 %v194, %v196
        %v198 = vrot.slane %v190, %v197
        %v200 = vunpack.c.l.s4 1966171168
        %v201 = vunpack.c.0.s8 %v200
        %v202 = vlaneseq
        %v203 = vshrl.u32 %v202, 7
        %v204 = vsub.s32 %v201, %v203
        %v205 = vrot.slane %v191, %v204
        %v206 = vcombine.high %v198, %v198
        %v207 = vcombine.high %v205, %v205
        %v210 = vunpack.c.l.s4 1966171168
        %v211 = vunpack.c.0.s8 %v210
        %v212 = vlaneseq
        %v213 = vshrl.u32 %v212, 7
        %v214 = vsub.s32 %v211, %v213
        %v215 = vrot.slane %v128, %v214
        %v216 = vcombine.high %v215, %v215
        %v218 = vunpack.c.l.s4 1966171168
        %v219 = vunpack.c.0.s8 %v218
        %v220 = vlaneseq
        %v221 = vshrl.u32 %v220, 7
        %v222 = vsub.s32 %v219, %v221
        %v223 = vrot.slane %v215, %v222
        %v225 = vunpack.c.l.s4 1966171168
        %v226 = vunpack.c.0.s8 %v225
        %v227 = vlaneseq
        %v228 = vshrl.u32 %v227, 7
        %v229 = vsub.s32 %v226, %v228
        %v230 = vrot.slane %v216, %v229
        %v231 = vcombine.high %v223, %v223
        %v232 = vcombine.high %v230, %v230
        %v235 = vunpack.c.l.s4 1966171168
        %v236 = vunpack.c.0.s8 %v235
        %v237 = vlaneseq
        %v238 = vshrl.u32 %v237, 7
        %v239 = vsub.s32 %v236, %v238
        %v240 = vrot.slane %v133, %v239
        %v241 = vcombine.high %v240, %v240
        %v243 = vunpack.c.l.s4 1966171168
        %v244 = vunpack.c.0.s8 %v243
        %v245 = vlaneseq
        %v246 = vshrl.u32 %v245, 7
        %v247 = vsub.s32 %v244, %v246
        %v248 = vrot.slane %v240, %v247
        %v250 = vunpack.c.l.s4 1966171168
        %v251 = vunpack.c.0.s8 %v250
        %v252 = vlaneseq
        %v253 = vshrl.u32 %v252, 7
        %v254 = vsub.s32 %v251, %v253
        %v255 = vrot.slane %v241, %v254
        %v256 = vcombine.high %v248, %v248
        %v257 = vcombine.high %v255, %v255
        %v260 = vunpack.c.l.s4 1966171168
        %v261 = vunpack.c.0.s8 %v260
        %v262 = vlaneseq
        %v263 = vshrl.u32 %v262, 7
        %v264 = vsub.s32 %v261, %v263
        %v265 = vrot.slane %v138, %v264
        %v266 = vcombine.high %v265, %v265
        %v268 = vunpack.c.l.s4 1966171168
        %v269 = vunpack.c.0.s8 %v268
        %v270 = vlaneseq
        %v271 = vshrl.u32 %v270, 7
        %v272 = vsub.s32 %v269, %v271
        %v273 = vrot.slane %v265, %v272
        %v275 = vunpack.c.l.s4 1966171168
        %v276 = vunpack.c.0.s8 %v275
        %v277 = vlaneseq
        %v278 = vshrl.u32 %v277, 7
        %v279 = vsub.s32 %v276, %v278
        %v280 = vrot.slane %v266, %v279
        %v281 = vcombine.high %v273, %v273
        %v282 = vcombine.high %v280, %v280
        %v285 = vunpack.c.l.s4 1966171168
        %v286 = vunpack.c.0.s8 %v285
        %v287 = vlaneseq
        %v288 = vshrl.u32 %v287, 7
        %v289 = vsub.s32 %v286, %v288
        %v290 = vrot.slane %v143, %v289
        %v291 = vcombine.high %v290, %v290
        %v293 = vunpack.c.l.s4 1966171168
        %v294 = vunpack.c.0.s8 %v293
        %v295 = vlaneseq
        %v296 = vshrl.u32 %v295, 7
        %v297 = vsub.s32 %v294, %v296
        %v298 = vrot.slane %v290, %v297
        %v300 = vunpack.c.l.s4 1966171168
        %v301 = vunpack.c.0.s8 %v300
        %v302 = vlaneseq
        %v303 = vshrl.u32 %v302, 7
        %v304 = vsub.s32 %v301, %v303
        %v305 = vrot.slane %v291, %v304
        %v306 = vcombine.high %v298, %v298
        %v307 = vcombine.high %v305, %v305
        %v310 = vunpack.c.l.s4 1966171168
        %v311 = vunpack.c.0.s8 %v310
        %v312 = vlaneseq
        %v313 = vshrl.u32 %v312, 7
        %v314 = vsub.s32 %v311, %v313
        %v315 = vrot.slane %v148, %v314
        %v316 = vcombine.high %v315, %v315
        %v318 = vunpack.c.l.s4 1966171168
        %v319 = vunpack.c.0.s8 %v318
        %v320 = vlaneseq
        %v321 = vshrl.u32 %v320, 7
        %v322 = vsub.s32 %v319, %v321
        %v323 = vrot.slane %v315, %v322
        %v325 = vunpack.c.l.s4 1966171168
        %v326 = vunpack.c.0.s8 %v325
        %v327 = vlaneseq
        %v328 = vshrl.u32 %v327, 7
        %v329 = vsub.s32 %v326, %v328
        %v330 = vrot.slane %v316, %v329
        %v331 = vcombine.high %v323, %v323
        %v332 = vcombine.high %v330, %v330
        %v335 = vunpack.c.l.s4 1966171168
        %v336 = vunpack.c.0.s8 %v335
        %v337 = vlaneseq
        %v338 = vshrl.u32 %v337, 7
        %v339 = vsub.s32 %v336, %v338
        %v340 = vrot.slane %v153, %v339
        %v341 = vcombine.high %v340, %v340
        %v343 = vunpack.c.l.s4 1966171168
        %v344 = vunpack.c.0.s8 %v343
        %v345 = vlaneseq
        %v346 = vshrl.u32 %v345, 7
        %v347 = vsub.s32 %v344, %v346
        %v348 = vrot.slane %v340, %v347
        %v350 = vunpack.c.l.s4 1966171168
        %v351 = vunpack.c.0.s8 %v350
        %v352 = vlaneseq
        %v353 = vshrl.u32 %v352, 7
        %v354 = vsub.s32 %v351, %v353
        %v355 = vrot.slane %v341, %v354
        %v356 = vcombine.high %v348, %v348
        %v357 = vcombine.high %v355, %v355
        %v358 = vlaneseq
        %v359 = vshrl.u32 %v358, 7
        %v360 = vsub.s32 0, %v359
        %v361 = vrot.slane %v198, %v360
        %v362 = vlaneseq
        %v363 = vshrl.u32 %v362, 7
        %v364 = vsub.s32 0, %v363
        %v365 = vrot.slane %v205, %v364
        %v366 = vlaneseq
        %v367 = vshrl.u32 %v366, 7
        %v368 = vsub.s32 0, %v367
        %v369 = vrot.slane %v206, %v368
        %v370 = vlaneseq
        %v371 = vshrl.u32 %v370, 7
        %v372 = vsub.s32 0, %v371
        %v373 = vrot.slane %v207, %v372
        %v378 = vlaneseq
        %v379 = vshrl.u32 %v378, 7
        %v380 = vsub.s32 0, %v379
        %v381 = vrot.slane %v223, %v380
        %v382 = vlaneseq
        %v383 = vshrl.u32 %v382, 7
        %v384 = vsub.s32 0, %v383
        %v385 = vrot.slane %v230, %v384
        %v386 = vlaneseq
        %v387 = vshrl.u32 %v386, 7
        %v388 = vsub.s32 0, %v387
        %v389 = vrot.slane %v231, %v388
        %v390 = vlaneseq
        %v391 = vshrl.u32 %v390, 7
        %v392 = vsub.s32 0, %v391
        %v393 = vrot.slane %v232, %v392
        %v398 = vlaneseq
        %v399 = vshrl.u32 %v398, 7
        %v400 = vsub.s32 0, %v399
        %v401 = vrot.slane %v248, %v400
        %v402 = vlaneseq
        %v403 = vshrl.u32 %v402, 7
        %v404 = vsub.s32 0, %v403
        %v405 = vrot.slane %v255, %v404
        %v406 = vlaneseq
        %v407 = vshrl.u32 %v406, 7
        %v408 = vsub.s32 0, %v407
        %v409 = vrot.slane %v256, %v408
        %v410 = vlaneseq
        %v411 = vshrl.u32 %v410, 7
        %v412 = vsub.s32 0, %v411
        %v413 = vrot.slane %v257, %v412
        %v418 = vlaneseq
        %v419 = vshrl.u32 %v418, 7
        %v420 = vsub.s32 0, %v419
        %v421 = vrot.slane %v273, %v420
        %v422 = vlaneseq
        %v423 = vshrl.u32 %v422, 7
        %v424 = vsub.s32 0, %v423
        %v425 = vrot.slane %v280, %v424
        %v426 = vlaneseq
        %v427 = vshrl.u32 %v426, 7
        %v428 = vsub.s32 0, %v427
        %v429 = vrot.slane %v281, %v428
        %v430 = vlaneseq
        %v431 = vshrl.u32 %v430, 7
        %v432 = vsub.s32 0, %v431
        %v433 = vrot.slane %v282, %v432
        %v438 = vlaneseq
        %v439 = vshrl.u32 %v438, 7
        %v440 = vsub.s32 0, %v439
        %v441 = vrot.slane %v298, %v440
        %v442 = vlaneseq
        %v443 = vshrl.u32 %v442, 7
        %v444 = vsub.s32 0, %v443
        %v445 = vrot.slane %v305, %v444
        %v446 = vlaneseq
        %v447 = vshrl.u32 %v446, 7
        %v448 = vsub.s32 0, %v447
        %v449 = vrot.slane %v306, %v448
        %v450 = vlaneseq
        %v451 = vshrl.u32 %v450, 7
        %v452 = vsub.s32 0, %v451
        %v453 = vrot.slane %v307, %v452
        %v458 = vlaneseq
        %v459 = vshrl.u32 %v458, 7
        %v460 = vsub.s32 0, %v459
        %v461 = vrot.slane %v323, %v460
        %v462 = vlaneseq
        %v463 = vshrl.u32 %v462, 7
        %v464 = vsub.s32 0, %v463
        %v465 = vrot.slane %v330, %v464
        %v466 = vlaneseq
        %v467 = vshrl.u32 %v466, 7
        %v468 = vsub.s32 0, %v467
        %v469 = vrot.slane %v331, %v468
        %v470 = vlaneseq
        %v471 = vshrl.u32 %v470, 7
        %v472 = vsub.s32 0, %v471
        %v473 = vrot.slane %v332, %v472
        %v478 = vlaneseq
        %v479 = vshrl.u32 %v478, 7
        %v480 = vsub.s32 0, %v479
        %v481 = vrot.slane %v348, %v480
        %v482 = vlaneseq
        %v483 = vshrl.u32 %v482, 7
        %v484 = vsub.s32 0, %v483
        %v485 = vrot.slane %v355, %v484
        %v486 = vlaneseq
        %v487 = vshrl.u32 %v486, 7
        %v488 = vsub.s32 0, %v487
        %v489 = vrot.slane %v356, %v488
        %v490 = vlaneseq
        %v491 = vshrl.u32 %v490, 7
        %v492 = vsub.s32 0, %v491
        %v493 = vrot.slane %v357, %v492
        %vm498 = vcmask 1040384
        %v499 = vsel %vm498, %v169, %v361
        %v500 = vsel %vm498, %v176, %v365
        %v501 = vsel %vm498, %v177, %v369
        %v502 = vsel %vm498, %v178, %v373
        %vm503 = vcmask 1041408
        %v504 = vsel %vm503, %v499, %v381
        %v505 = vsel %vm503, %v500, %v385
        %v506 = vsel %vm503, %v501, %v389
        %v507 = vsel %vm503, %v502, %v393
        %vm508 = vcmask 1042432
        %v509 = vsel %vm508, %v504, %v401
        %v510 = vsel %vm508, %v505, %v405
        %v511 = vsel %vm508, %v506, %v409
        %v512 = vsel %vm508, %v507, %v413
        %vm513 = vcmask 1043456
        %v514 = vsel %vm513, %v509, %v421
        %v515 = vsel %vm513, %v510, %v425
        %v516 = vsel %vm513, %v511, %v429
        %v517 = vsel %vm513, %v512, %v433
        %vm518 = vcmask 1044480
        %v519 = vsel %vm518, %v514, %v441
        %v520 = vsel %vm518, %v515, %v445
        %v521 = vsel %vm518, %v516, %v449
        %v522 = vsel %vm518, %v517, %v453
        %vm523 = vcmask 1045504
        %v524 = vsel %vm523, %v519, %v461
        %v525 = vsel %vm523, %v520, %v465
        %v526 = vsel %vm523, %v521, %v469
        %v527 = vsel %vm523, %v522, %v473
        %vm528 = vcmask 1046528
        %v529 = vsel %vm528, %v524, %v481
        %v530 = vsel %vm528, %v525, %v485
        %v531 = vsel %vm528, %v526, %v489
        %v532 = vsel %vm528, %v527, %v493
        %533 = vst [vmem:[%s56] sm:$0xff] %v529
        %534 = vst [vmem:[%s56 + $0x8] sm:$0xff] %v530
        %535 = vst [vmem:[%s56 + $0x10] sm:$0xff] %v531
        %536 = vst [vmem:[%s56 + $0x18] sm:$0xff] %v532
        %s537 = sand.u32 %s29, 1
        %s538 = scalar_lea.sflag [#allocation8], %s537
        %s539 = sand.u32 %s29, 1
        %s540 = smul.addr %s539, 32
        %s541 = scalar_lea.vmem [#allocation7], %s540
        // Predicated region
        $region17: #{tpu_custom_call.1} parent=11 // pred_check
          %p542 = pneg %p35
        $region18: #{tpu_custom_call.1} parent=11 // pred_check_branch
          %544 = sbr.rel (%p542) target = $region20
        $region19: #{tpu_custom_call.1} parent=11 // pred_region
          %s546 = ssub.s32 512, 512
          %547 = vsyncadd %s538, %s546
          %s548 = smul.addr %s20, 128
          %s549 = scalar_lea.hbm %s3, %s548
          %s550 = sshll.u32 %s541, 4
          %s551 = int_to_ptr.vmem [resolvable:$true] %s550
          %556 = dma.vmem_to_hbm [thread:$0]  %s551, 512, %s549, %s538, 128, 256, 8
        $region20: #{tpu_custom_call.1} parent=11 // pred_fallthru
          _
      $region12: #{tpu_custom_call.1} parent=5 // pred_fallthru
        _
      %p557 = scmp.le.s32.totalorder 1, %s20
      // Predicated region
      $region21: #{tpu_custom_call.1} parent=5 // pred_check
        %p558 = pneg %p557
      $region22: #{tpu_custom_call.1} parent=5 // pred_check_branch
        %560 = sbr.rel (%p558) target = $region24
      $region23: #{tpu_custom_call.1} parent=5 // pred_region
        %s561 = ssub.s32 %s20, 1
        // Predicated region
        $region25: #{tpu_custom_call.1} parent=23 // pred_check
          %p562 = pneg %p41
        $region26: #{tpu_custom_call.1} parent=23 // pred_check_branch
          %564 = sbr.rel (%p562) target = $region28
        $region27: #{tpu_custom_call.1} parent=23 // pred_region
          %s565 = sand.u32 %s32, 1
          %s566 = scalar_lea.sflag [#allocation8], %s565
          %s567 = sand.u32 %s32, 1
          %s568 = smul.addr %s567, 32
          %s569 = scalar_lea.vmem [#allocation7], %s568
          %570 = dma.done %s566, 512
        $region28: #{tpu_custom_call.1} parent=23 // pred_fallthru
          _
      $region24: #{tpu_custom_call.1} parent=5 // pred_fallthru
        _
    $region6: #{tpu_custom_call.1} parent=1 // loop_footer
      %s24 = sadd.s32 1, %s20
    $region7: #{tpu_custom_call.1} parent=1 // loop_footer_branch
      %19 = sbr.rel target = $region3
    $region8: #{tpu_custom_call.1} parent=1 // loop_exit
      _
    %571 = vsyncpa [#allocation8], 1
    %s572 = scalar_lea.sflag [#allocation8], 1
    %573 = vsyncpa %s572, 1
  %574 = vsyncmov [#allocation3]
  %s575 = vpop.sfrf %574
  %p576 = scmp.eq.s32.totalorder %s575, 0
  %p577 = pneg %p576
  %579 = shalt.err (%p577)
  %s580 = scalar_lea.sflag [#allocation3], 1
  %581 = vsyncmov %s580
  %s582 = vpop.sfrf %581
  %p583 = scmp.eq.s32.totalorder %s582, 0
  %p584 = pneg %p583
  %586 = shalt.err (%p584)

</llo_original>
